<compile_context>
chip_gen: v7x
topology: tpu7x:2x2x1
jax: 0.10.0
libtpu: 0.0.40
codegen_flags: <defaults>
</compile_context>

<pallas_src>
import jax
import jax.numpy as jnp
import numpy as np
from jax.experimental import pallas as pl
from jax.experimental.pallas import tpu as pltpu

NUM_FEATURES = 13
L0 = 32
LANE = 128

SHIFT = np.array(
    [12.615314483642578, 0.0, -0.00042932009091600776, 10.0, 3.0, 2.0,
     4.006599192507565e-05, -0.4567539691925049, -0.019999638199806213,
     -19.99979019165039, -149.963134765625, 0.004197417292743921,
     -0.0004279722925275564], dtype=np.float32)

SCALE = np.array(
    [155663427.38468552, 25787.57421875, 0.000783147057518363, 2, 20, 40,
     1.9999514701485168, 1.02848482131958, 0.03999875485897064,
     39.99972915649414, 299.958740234375, 1301.8299090280198,
     0.0007813300180714577], dtype=np.float32)


def _round_up(n, m):
    return ((n + m - 1) // m) * m


def _cdiv(a, b):
    return -(-a // b)


def ghost_kernel(xT_ref, w0t_ref, b0_ref, w1_ref, b1_ref, out_ref):
    # Feature-major: batch sits on the lane (last) axis everywhere.
    # (L0, TB) = (L0, F) @ (F, TB); normalization is pre-folded into W0'/b0'.
    h = jnp.dot(w0t_ref[...], xT_ref[...],
                preferred_element_type=jnp.float32)
    h = jnp.maximum(h + b0_ref[...], 0.0)          # b0 is (L0, 1), lane bcast
    # (1, TB) = (1, L0) @ (L0, TB), then sigmoid -> lane-dense (1, TB) store.
    y = jnp.dot(w1_ref[...], h,
                preferred_element_type=jnp.float32) + b1_ref[...]
    out_ref[...] = jax.nn.sigmoid(y).astype(out_ref.dtype)


def fold_normalization(w0, b0, shift, scale):
    """Fold (x - shift)/scale into layer0's weights, in float64 on host.

    Returns W0' transposed (L0, F) and b0' as a column (L0, 1), the shapes the
    feature-major kernel consumes directly.
    """
    w0_64 = np.asarray(w0, dtype=np.float64)              # (F, L0)
    b0_64 = np.asarray(b0, dtype=np.float64).reshape(-1)  # (L0,)
    shift_64 = np.asarray(shift, dtype=np.float64).reshape(-1)
    scale_64 = np.asarray(scale, dtype=np.float64).reshape(-1)
    w0_f = w0_64 / scale_64[:, None]                      # (F, L0)
    b0_f = b0_64 - (shift_64 / scale_64) @ w0_64          # (L0,)
    w0t_f = np.ascontiguousarray(w0_f.T)                  # (L0, F)
    return (jnp.asarray(w0t_f, dtype=jnp.float32),
            jnp.asarray(b0_f.reshape(L0, 1), dtype=jnp.float32))


def _choose_tiling(b, tb_max):
    """Adaptive lane tiling: bounded padding, >=2 tiles for mid-size batches."""
    n_tiles = _cdiv(b, tb_max)
    if n_tiles == 1 and b >= 2 * LANE:
        n_tiles = 2                      # give both v7x TensorCores work
    tb = _round_up(_cdiv(b, n_tiles), LANE)
    b_pad = n_tiles * tb
    return n_tiles, tb, b_pad


def ghost_forward(x, w0t_f, b0_col, w1_row, b1, *, tb_max=32768):
    """x: (B, F) float32.  w0t_f: (L0, F) folded, b0_col: (L0, 1),
    w1_row: (1, L0), b1: (1, 1).  Returns (B, 1) float32."""
    b, f = x.shape
    n_tiles, tb, b_pad = _choose_tiling(b, tb_max)

    # Feature-major layout: one transpose of the input slab, then every DMA
    # row inside the kernel is 4*TB contiguous bytes and every vreg is full.
    xT = jnp.transpose(x)                               # (F, B)
    if b_pad != b:
        xT = jnp.pad(xT, ((0, 0), (0, b_pad - b)))      # zero cols -> sliced off

    out = pl.pallas_call(
        ghost_kernel,
        out_shape=jax.ShapeDtypeStruct((1, b_pad), jnp.float32),
        grid_spec=pl.GridSpec(
            grid=(n_tiles,),
            in_specs=[
                pl.BlockSpec((f, tb), lambda i: (0, i)),        # x^T tile
                pl.BlockSpec(w0t_f.shape, lambda i: (0, 0)),    # W0'^T (L0, F)
                pl.BlockSpec(b0_col.shape, lambda i: (0, 0)),   # b0' (L0, 1)
                pl.BlockSpec(w1_row.shape, lambda i: (0, 0)),   # W1^T (1, L0)
                pl.BlockSpec(b1.shape, lambda i: (0, 0)),       # b1 (1, 1)
            ],
            out_specs=pl.BlockSpec((1, tb), lambda i: (0, i)),  # lane-dense
        ),
        compiler_params=pltpu.CompilerParams(
            dimension_semantics=("parallel",)),
    )(xT, w0t_f, b0_col, w1_row, b1)
    return out[0, :b].reshape(b, 1)


def init_params(key):
    """Deterministic nn.Linear-style init (uniform(-1/sqrt(fan_in), +))."""
    k0, k1, k2, k3 = jax.random.split(key, 4)
    bound0 = 1.0 / np.sqrt(NUM_FEATURES)
    bound1 = 1.0 / np.sqrt(L0)
    w0 = jax.random.uniform(k0, (NUM_FEATURES, L0), jnp.float32, -bound0, bound0)
    b0 = jax.random.uniform(k1, (1, L0), jnp.float32, -bound0, bound0)
    w1 = jax.random.uniform(k2, (L0, 1), jnp.float32, -bound1, bound1)
    b1 = jax.random.uniform(k3, (1, 1), jnp.float32, -bound1, bound1)
    return w0, b0, w1, b1


def reference_forward(x, shift, scale, w0, b0, w1, b1):
    """Unfused reference matching the PyTorch module."""
    xn = (x - shift) / scale
    h = jnp.maximum(xn @ w0 + b0, 0.0)
    return jax.nn.sigmoid(h @ w1 + b1)


if __name__ == "__main__":
    key = jax.random.PRNGKey(0)
    kx, kp = jax.random.split(key)

    shift = jnp.asarray(SHIFT).reshape(1, NUM_FEATURES)
    scale = jnp.asarray(SCALE).reshape(1, NUM_FEATURES)
    w0, b0, w1, b1 = init_params(kp)

    # Host-side folding of normalization into layer0 (float64 for accuracy).
    w0t_f, b0_col = fold_normalization(w0, b0, SHIFT, SCALE)
    w1_row = jnp.reshape(w1, (1, L0))

    # Small batch (single tile) and a batch exercising multi-tile + remainder
    # padding + the >=2-tile split.
    for batch, tb_max in ((8, 32768), (300, 256)):
        x = jax.random.normal(kx, (batch, NUM_FEATURES), dtype=jnp.float32)

        out = ghost_forward(x, w0t_f, b0_col, w1_row, b1, tb_max=tb_max)
        out = jax.block_until_ready(out)

        ref = reference_forward(x, shift, scale, w0, b0, w1, b1)
        np.testing.assert_allclose(np.asarray(out), np.asarray(ref),
                                   rtol=1e-5, atol=1e-6)

    # Re-validate the normalization folding at realistic input magnitudes
    # (e.g. feature 0 ~ 1e8), as flagged in the review.
    z = jax.random.normal(kx, (257, NUM_FEATURES), dtype=jnp.float32)
    x_real = z * scale + shift
    out = jax.block_until_ready(
        ghost_forward(x_real, w0t_f, b0_col, w1_row, b1, tb_max=128))
    ref = reference_forward(x_real, shift, scale, w0, b0, w1, b1)
    np.testing.assert_allclose(np.asarray(out), np.asarray(ref),
                               rtol=1e-4, atol=1e-5)

    print("KERNEL_OK")
</pallas_src>

<mosaic_0001>
module attributes {stable_mosaic.version = 11 : i64} {
  func.func @ghost_kernel(%arg0: i32, %arg1: memref<13x128xf32, #tpu.memory_space<vmem>>, %arg2: memref<32x13xf32, #tpu.memory_space<vmem>>, %arg3: memref<32x1xf32, #tpu.memory_space<vmem>>, %arg4: memref<1x32xf32, #tpu.memory_space<vmem>>, %arg5: memref<1x1xf32, #tpu.memory_space<vmem>>, %arg6: memref<1x128xf32, #tpu.memory_space<vmem>>) attributes {dimension_semantics = [#tpu.dimension_semantics<parallel>], iteration_bounds = array<i64: 1>, scalar_prefetch = 0 : i64, scratch_operands = 0 : i64, tpu.core_type = #tpu.core_type<tc>, window_params = [{transform_indices = @transform_0, window_bounds = array<i64: 13, 128>}, {pipeline_mode = #tpu.pipeline_mode<synchronous>, transform_indices = @transform_1, window_bounds = array<i64: 32, 13>}, {pipeline_mode = #tpu.pipeline_mode<synchronous>, transform_indices = @transform_2, window_bounds = array<i64: 32, 1>}, {pipeline_mode = #tpu.pipeline_mode<synchronous>, transform_indices = @transform_3, window_bounds = array<i64: 1, 32>}, {pipeline_mode = #tpu.pipeline_mode<synchronous>, transform_indices = @transform_4, window_bounds = array<i64: 1, 1>}, {transform_indices = @transform_5, window_bounds = array<i64: 1, 128>}]} {
    %c0 = arith.constant 0 : index
    %c0_0 = arith.constant 0 : index
    %0 = vector.load %arg2[%c0, %c0_0] : memref<32x13xf32, #tpu.memory_space<vmem>>, vector<32x13xf32>
    %c0_1 = arith.constant 0 : index
    %c0_2 = arith.constant 0 : index
    %1 = vector.load %arg1[%c0_1, %c0_2] : memref<13x128xf32, #tpu.memory_space<vmem>>, vector<13x128xf32>
    %cst = arith.constant dense<0.000000e+00> : vector<32x128xf32>
    %2 = tpu.matmul %0, %1, %cst {dimension_numbers = #tpu.dot_dimension_numbers<[1], [0], [0], [1], [0, 0, 1, 1], [], []>} : vector<32x13xf32>, vector<13x128xf32>, vector<32x128xf32> -> vector<32x128xf32>
    %c0_3 = arith.constant 0 : index
    %c0_4 = arith.constant 0 : index
    %3 = vector.load %arg3[%c0_3, %c0_4] : memref<32x1xf32, #tpu.memory_space<vmem>>, vector<32x1xf32>
    %4 = vector.broadcast %3 : vector<32x1xf32> to vector<32x128xf32>
    %5 = arith.addf %2, %4 : vector<32x128xf32>
    %cst_5 = arith.constant 0.000000e+00 : f32
    %6 = vector.broadcast %cst_5 : f32 to vector<32x128xf32>
    %7 = arith.maximumf %5, %6 : vector<32x128xf32>
    %c0_6 = arith.constant 0 : index
    %c0_7 = arith.constant 0 : index
    %8 = vector.load %arg4[%c0_6, %c0_7] : memref<1x32xf32, #tpu.memory_space<vmem>>, vector<1x32xf32>
    %cst_8 = arith.constant dense<0.000000e+00> : vector<1x128xf32>
    %9 = tpu.matmul %8, %7, %cst_8 {dimension_numbers = #tpu.dot_dimension_numbers<[1], [0], [0], [1], [0, 0, 1, 1], [], []>} : vector<1x32xf32>, vector<32x128xf32>, vector<1x128xf32> -> vector<1x128xf32>
    %c0_9 = arith.constant 0 : index
    %c0_10 = arith.constant 0 : index
    %10 = vector.load %arg5[%c0_9, %c0_10] : memref<1x1xf32, #tpu.memory_space<vmem>>, vector<1x1xf32>
    %11 = vector.broadcast %10 : vector<1x1xf32> to vector<1x128xf32>
    %12 = arith.addf %9, %11 : vector<1x128xf32>
    %13 = arith.negf %12 : vector<1x128xf32>
    %14 = math.exp %13 : vector<1x128xf32>
    %cst_11 = arith.constant 1.000000e+00 : f32
    %15 = vector.broadcast %cst_11 : f32 to vector<1x128xf32>
    %16 = arith.addf %15, %14 : vector<1x128xf32>
    %17 = arith.divf %15, %16 : vector<1x128xf32>
    %c0_12 = arith.constant 0 : index
    %c0_13 = arith.constant 0 : index
    %18 = vector.load %arg6[%c0_12, %c0_13] : memref<1x128xf32, #tpu.memory_space<vmem>>, vector<1x128xf32>
    tpu.vector_store %arg6[%c0_12, %c0_13], %17 {strides = array<i32>} : memref<1x128xf32, #tpu.memory_space<vmem>>, vector<1x128xf32>,
    return
  }
  func.func @transform_0(%arg0: i32) -> (i32, i32) {
    %c0_i32 = arith.constant 0 : i32
    %c0_i32_0 = arith.constant 0 : i32
    return %c0_i32, %arg0 : i32, i32
  }
  func.func @transform_1(%arg0: i32) -> (i32, i32) {
    %c0_i32 = arith.constant 0 : i32
    %c0_i32_0 = arith.constant 0 : i32
    %c0_i32_1 = arith.constant 0 : i32
    return %c0_i32, %c0_i32_0 : i32, i32
  }
  func.func @transform_2(%arg0: i32) -> (i32, i32) {
    %c0_i32 = arith.constant 0 : i32
    %c0_i32_0 = arith.constant 0 : i32
    %c0_i32_1 = arith.constant 0 : i32
    return %c0_i32, %c0_i32_0 : i32, i32
  }
  func.func @transform_3(%arg0: i32) -> (i32, i32) {
    %c0_i32 = arith.constant 0 : i32
    %c0_i32_0 = arith.constant 0 : i32
    %c0_i32_1 = arith.constant 0 : i32
    return %c0_i32, %c0_i32_0 : i32, i32
  }
  func.func @transform_4(%arg0: i32) -> (i32, i32) {
    %c0_i32 = arith.constant 0 : i32
    %c0_i32_0 = arith.constant 0 : i32
    %c0_i32_1 = arith.constant 0 : i32
    return %c0_i32, %c0_i32_0 : i32, i32
  }
  func.func @transform_5(%arg0: i32) -> (i32, i32) {
    %c0_i32 = arith.constant 0 : i32
    %c0_i32_0 = arith.constant 0 : i32
    return %c0_i32, %arg0 : i32, i32
  }
}

</mosaic_0001>

<llo_original>
// kernel: tpu_custom_call.1
$region0: #{tpu_custom_call.1}
  #allocation0 [shape = 'u32[]', space=smem, size = 0x4, offset = 0x4, fixed_abs, tag = 'smem constant byte address 0x4 - core index']
  #allocation1 [shape = 'u32[144,128]{1,0:T(1,128)}', space=vmem, size = 0x12000, scoped, tag = 'internal scratch']
  #allocation2 [shape = 'f32[1,1]{1,0:T(1,128)S(1)}', space=vmem, size = 0x200, scoped, tag = 'scoped memory for tpu_custom_call.1']
  %s0 = inlined_call_operand.vmem [shape: f32[13,128], index: 0, kind: input, shape index: {}]
  %s1 = inlined_call_operand.vmem [shape: f32[32,13], index: 1, kind: input, shape index: {}]
  %s2 = inlined_call_operand.vmem [shape: f32[32,1], index: 2, kind: input, shape index: {}]
  %s3 = inlined_call_operand.vmem [shape: f32[1,32], index: 3, kind: input, shape index: {}]
  %s4 = inlined_call_operand.<no memory space> [shape: f32[1,1], index: 4, kind: input, shape index: {}]
  %s5 = inlined_call_operand.hbm [shape: f32[1,128], index: 5, kind: output, shape index: {}]
  %s6 = sld [smem:[#allocation0]]
  $region30: #{tpu_custom_call.1} parent=0
    _
  %s8 = ssub.s32 1, %s6
  %s9 = scalar_select 0, %s8, %s6
  %v10 = vstv %s4
  %11 = vst [vmem:[#allocation2] sm:$0x1] %v10
  $region1: #{tpu_custom_call.1} parent=0
    #allocation3 [shape = 'u8[512]{0}', space=vmem, size = 0x400, scoped, tag = 'output window, operand 0, single buffered']
    #allocation4 [shape = 's32[1]{0}', space=sflag, size = 0x4, scoped, tag = 'scoped memory for tpu_custom_call.1']
    %12 = vsyncpa [#allocation4], 0
    // Predicated region
    $region2: #{tpu_custom_call.1} parent=1 // pred_check
      _
    $region3: #{tpu_custom_call.1} parent=1 // pred_check_branch
      %14 = sbr.rel (0) target = $region5
    $region4: #{tpu_custom_call.1} parent=1 // pred_region
      _
    $region5: #{tpu_custom_call.1} parent=1 // pred_fallthru
      _
    // Predicated region
    $region6: #{tpu_custom_call.1} parent=1 // pred_check
      _
    $region7: #{tpu_custom_call.1} parent=1 // pred_check_branch
      %16 = sbr.rel (0) target = $region9
    $region8: #{tpu_custom_call.1} parent=1 // pred_region
      _
    $region9: #{tpu_custom_call.1} parent=1 // pred_fallthru
      _
    // Predicated region
    $region10: #{tpu_custom_call.1} parent=1 // pred_check
      _
    $region11: #{tpu_custom_call.1} parent=1 // pred_check_branch
      %18 = sbr.rel (0) target = $region13
    $region12: #{tpu_custom_call.1} parent=1 // pred_region
      _
    $region13: #{tpu_custom_call.1} parent=1 // pred_fallthru
      _
    // Predicated region
    $region14: #{tpu_custom_call.1} parent=1 // pred_check
      _
    $region15: #{tpu_custom_call.1} parent=1 // pred_check_branch
      %20 = sbr.rel (0) target = $region17
    $region16: #{tpu_custom_call.1} parent=1 // pred_region
      _
    $region17: #{tpu_custom_call.1} parent=1 // pred_fallthru
      _
    // Predicated region
    $region18: #{tpu_custom_call.1} parent=1 // pred_check
      _
    $region19: #{tpu_custom_call.1} parent=1 // pred_check_branch
      %22 = sbr.rel (0) target = $region21
    $region20: #{tpu_custom_call.1} parent=1 // pred_region
      _
    $region21: #{tpu_custom_call.1} parent=1 // pred_fallthru
      _
    %v23 = vld [vmem:[%s1] sm:$0xff]
    %v24 = vld [vmem:[%s1 + $0x8] sm:$0xff]
    %v25 = vld [vmem:[%s1 + $0x10] sm:$0xff]
    %v26 = vld [vmem:[%s1 + $0x18] sm:$0xff]
    %v27 = vld [vmem:[%s0] sm:$0xff]
    %v28 = vld [vmem:[%s0 + $0x8] sm:$0x1f]
    %v29 = vld [vmem:[%s2] sm:$0xff]
    %v30 = vld [vmem:[%s2 + $0x8] sm:$0xff]
    %v31 = vld [vmem:[%s2 + $0x10] sm:$0xff]
    %v32 = vld [vmem:[%s2 + $0x18] sm:$0xff]
    %34 = vset.pattern.permute.xlu0 0
    %35 = vperm.xlu0 %34, %v29
    %v36 = vpop.permute.xlu0 %35
    %39 = vset.pattern.permute.xlu0 0
    %40 = vperm.xlu0 %39, %v30
    %v41 = vpop.permute.xlu0 %40
    %44 = vset.pattern.permute.xlu0 0
    %45 = vperm.xlu0 %44, %v31
    %v46 = vpop.permute.xlu0 %45
    %49 = vset.pattern.permute.xlu0 0
    %50 = vperm.xlu0 %49, %v32
    %v51 = vpop.permute.xlu0 %50
    %vm53 = vcmask 105472
    %v55 = vsel %vm53, %v23, 0
    %v58 = vsel %vm53, %v24, 0
    %v61 = vsel %vm53, %v25, 0
    %v64 = vsel %vm53, %v26, 0
    %vm66 = vcmask 1044480
    %v68 = vsel %vm66, %v28, 0
    %70 = vmatprep.subr.mxu0 0.0
    %71 = vmatpush1.msra.mxu0 %v27
    %72 = vmatprep.subr.mxu0 0.0
    %73 = vmatpush1.msra.mxu0 %v68
    %74 = vmatprep.subr.mxu0 0.0
    %75 = vmatpush1.msra.mxu0 0.0
    %76 = vmatprep.subr.mxu0 0.0
    %77 = vmatpush1.msra.mxu0 0.0
    %78 = vmatprep.subr.mxu0 0.0
    %79 = vmatpush1.msra.mxu0 0.0
    %80 = vmatprep.subr.mxu0 0.0
    %81 = vmatpush1.msra.mxu0 0.0
    %82 = vmatprep.subr.mxu0 0.0
    %83 = vmatpush1.msra.mxu0 0.0
    %84 = vmatprep.subr.mxu0 0.0
    %85 = vmatpush1.msra.mxu0 0.0
    %86 = vmatprep.subr.mxu0 0.0
    %87 = vmatpush1.msra.mxu0 0.0
    %88 = vmatprep.subr.mxu0 0.0
    %89 = vmatpush1.msra.mxu0 0.0
    %90 = vmatprep.subr.mxu0 0.0
    %91 = vmatpush1.msra.mxu0 0.0
    %92 = vmatprep.subr.mxu0 0.0
    %93 = vmatpush1.msra.mxu0 0.0
    %94 = vmatprep.subr.mxu0 0.0
    %95 = vmatpush1.msra.mxu0 0.0
    %96 = vmatprep.subr.mxu0 0.0
    %97 = vmatpush1.msra.mxu0 0.0
    %98 = vmatprep.subr.mxu0 0.0
    %99 = vmatpush1.msra.mxu0 0.0
    %100 = vmatprep.subr.mxu0 0.0
    %101 = vmatpush1.msra.mxu0 0.0
    %102 = vmatprep.subr.mxu0 0.0
    %103 = vmatpush1.msra.mxu0 0.0
    %104 = vmatprep.subr.mxu0 0.0
    %105 = vmatpush1.msra.mxu0 0.0
    %106 = vmatprep.subr.mxu0 0.0
    %107 = vmatpush1.msra.mxu0 0.0
    %108 = vmatprep.subr.mxu0 0.0
    %109 = vmatpush1.msra.mxu0 0.0
    %110 = vmatprep.subr.mxu0 0.0
    %111 = vmatpush1.msra.mxu0 0.0
    %112 = vmatprep.subr.mxu0 0.0
    %113 = vmatpush1.msra.mxu0 0.0
    %114 = vmatprep.subr.mxu0 0.0
    %115 = vmatpush1.msra.mxu0 0.0
    %116 = vmatprep.subr.mxu0 0.0
    %117 = vmatpush1.msra.mxu0 0.0
    %118 = vmatprep.subr.mxu0 0.0
    %119 = vmatpush1.msra.mxu0 0.0
    %120 = vmatprep.subr.mxu0 0.0
    %121 = vmatpush1.msra.mxu0 0.0
    %122 = vmatprep.subr.mxu0 0.0
    %123 = vmatpush1.msra.mxu0 0.0
    %124 = vmatprep.subr.mxu0 0.0
    %125 = vmatpush1.msra.mxu0 0.0
    %126 = vmatprep.subr.mxu0 0.0
    %127 = vmatpush1.msra.mxu0 0.0
    %128 = vmatprep.subr.mxu0 0.0
    %129 = vmatpush1.msra.mxu0 0.0
    %130 = vmatprep.subr.mxu0 0.0
    %131 = vmatpush1.msra.mxu0 0.0
    %132 = vmatprep.subr.mxu0 0.0
    %133 = vmatpush1.msra.mxu0 0.0
    %134 = vmatprep.mubr.f32.mxu0 0.0
    %135 = vmatmul.mubr.f32.gmra.mrb[0].mxu0 %v55
    %v136 = vpop.f32.mrb[0].mxu0
    %v137 = vadd.f32 %v36, %v136
    %v138 = vpop.f32.mrb[0].mxu0
    %139 = vmatprep.mubr.f32.mxu0 0.0
    %140 = vmatmul.mubr.f32.gmra.mrb[0].mxu0 %v58
    %v141 = vpop.f32.mrb[0].mxu0
    %v142 = vadd.f32 %v41, %v141
    %v143 = vpop.f32.mrb[0].mxu0
    %144 = vmatprep.mubr.f32.mxu0 0.0
    %145 = vmatmul.mubr.f32.gmra.mrb[0].mxu0 %v61
    %v146 = vpop.f32.mrb[0].mxu0
    %v147 = vadd.f32 %v46, %v146
    %v148 = vpop.f32.mrb[0].mxu0
    %149 = vmatprep.mubr.f32.mxu0 0.0
    %150 = vmatmul.mubr.f32.gmra.mrb[0].mxu0 %v64
    %v151 = vpop.f32.mrb[0].mxu0
    %v152 = vadd.f32 %v51, %v151
    %v153 = vpop.f32.mrb[0].mxu0
    %154 = vdwg.mxu0
    %v155 = vmax.f32 %v137, 0.0
    %v156 = vmax.f32 %v142, 0.0
    %v157 = vmax.f32 %v147, 0.0
    %v158 = vmax.f32 %v152, 0.0
    %v159 = vld [vmem:[%s3] sm:$0x1]
    %v160 = vld [vmem:[#allocation2] sm:$0x1]
    %162 = vset.pattern.permute.xlu0 0
    %163 = vperm.xlu0 %162, %v160
    %v164 = vpop.permute.xlu0 %163
    %v166 = vlaneseq
    %v167 = vshrl.u32 %v166, 7
    %v168 = vsub.s32 0, %v167
    %v169 = vrot.slane %v164, %v168
    %vm170 = vcmask 261120
    %v172 = vsel %vm170, %v159, 0
    %174 = vmatprep.subr.mxu0 0.0
    %175 = vmatpush1.msra.mxu0 %v155
    %176 = vmatprep.subr.mxu0 0.0
    %177 = vmatpush1.msra.mxu0 %v156
    %178 = vmatprep.subr.mxu0 0.0
    %179 = vmatpush1.msra.mxu0 %v157
    %180 = vmatprep.subr.mxu0 0.0
    %181 = vmatpush1.msra.mxu0 %v158
    %182 = vmatprep.subr.mxu0 0.0
    %183 = vmatpush1.msra.mxu0 0.0
    %184 = vmatprep.subr.mxu0 0.0
    %185 = vmatpush1.msra.mxu0 0.0
    %186 = vmatprep.subr.mxu0 0.0
    %187 = vmatpush1.msra.mxu0 0.0
    %188 = vmatprep.subr.mxu0 0.0
    %189 = vmatpush1.msra.mxu0 0.0
    %190 = vmatprep.subr.mxu0 0.0
    %191 = vmatpush1.msra.mxu0 0.0
    %192 = vmatprep.subr.mxu0 0.0
    %193 = vmatpush1.msra.mxu0 0.0
    %194 = vmatprep.subr.mxu0 0.0
    %195 = vmatpush1.msra.mxu0 0.0
    %196 = vmatprep.subr.mxu0 0.0
    %197 = vmatpush1.msra.mxu0 0.0
    %198 = vmatprep.subr.mxu0 0.0
    %199 = vmatpush1.msra.mxu0 0.0
    %200 = vmatprep.subr.mxu0 0.0
    %201 = vmatpush1.msra.mxu0 0.0
    %202 = vmatprep.subr.mxu0 0.0
    %203 = vmatpush1.msra.mxu0 0.0
    %204 = vmatprep.subr.mxu0 0.0
    %205 = vmatpush1.msra.mxu0 0.0
    %206 = vmatprep.subr.mxu0 0.0
    %207 = vmatpush1.msra.mxu0 0.0
    %208 = vmatprep.subr.mxu0 0.0
    %209 = vmatpush1.msra.mxu0 0.0
    %210 = vmatprep.subr.mxu0 0.0
    %211 = vmatpush1.msra.mxu0 0.0
    %212 = vmatprep.subr.mxu0 0.0
    %213 = vmatpush1.msra.mxu0 0.0
    %214 = vmatprep.subr.mxu0 0.0
    %215 = vmatpush1.msra.mxu0 0.0
    %216 = vmatprep.subr.mxu0 0.0
    %217 = vmatpush1.msra.mxu0 0.0
    %218 = vmatprep.subr.mxu0 0.0
    %219 = vmatpush1.msra.mxu0 0.0
    %220 = vmatprep.subr.mxu0 0.0
    %221 = vmatpush1.msra.mxu0 0.0
    %222 = vmatprep.subr.mxu0 0.0
    %223 = vmatpush1.msra.mxu0 0.0
    %224 = vmatprep.subr.mxu0 0.0
    %225 = vmatpush1.msra.mxu0 0.0
    %226 = vmatprep.subr.mxu0 0.0
    %227 = vmatpush1.msra.mxu0 0.0
    %228 = vmatprep.subr.mxu0 0.0
    %229 = vmatpush1.msra.mxu0 0.0
    %230 = vmatprep.subr.mxu0 0.0
    %231 = vmatpush1.msra.mxu0 0.0
    %232 = vmatprep.subr.mxu0 0.0
    %233 = vmatpush1.msra.mxu0 0.0
    %234 = vmatprep.subr.mxu0 0.0
    %235 = vmatpush1.msra.mxu0 0.0
    %236 = vmatprep.subr.mxu0 0.0
    %237 = vmatpush1.msra.mxu0 0.0
    %238 = vmatprep.mubr.f32.mxu0 0.0
    %239 = vmatmul.mubr.f32.gmra.mrb[0].mxu0 %v172
    %v240 = vpop.f32.mrb[0].mxu0
    %v241 = vadd.f32 %v169, %v240
    %v242 = vpop.f32.mrb[0].mxu0
    %243 = vdwg.mxu0
    %v244 = vxor.u32 %v241, 2147483648
    %v245 = vmul.f32 %v244, 1.442695
    %v246 = vpow.pop %v245
    %v247 = vadd.f32 %v246, 1.0
    %v248 = vrcp.pop %v247
    %v249 = vmul.f32 1.0, %v248
    %250 = vst [vmem:[#allocation3] sm:$0x1] %v249
    // Predicated region
    $region22: #{tpu_custom_call.1} parent=1 // pred_check
      _
    $region23: #{tpu_custom_call.1} parent=1 // pred_check_branch
      %252 = sbr.rel (0) target = $region25
    $region24: #{tpu_custom_call.1} parent=1 // pred_region
      %s254 = ssub.s32 16, 16
      %255 = vsyncadd [#allocation4], %s254
      %s257 = sshll.u32 [#allocation3], 4
      %s258 = int_to_ptr.vmem [resolvable:$true] %s257
      %260 = dma.vmem_to_hbm [thread:$0]  %s258, 16, %s5, [#allocation4]
    $region25: #{tpu_custom_call.1} parent=1 // pred_fallthru
      _
    // Predicated region
    $region26: #{tpu_custom_call.1} parent=1 // pred_check
      _
    $region27: #{tpu_custom_call.1} parent=1 // pred_check_branch
      %262 = sbr.rel (0) target = $region29
    $region28: #{tpu_custom_call.1} parent=1 // pred_region
      %263 = dma.done [#allocation4], 16
    $region29: #{tpu_custom_call.1} parent=1 // pred_fallthru
      _
    %264 = vsyncpa [#allocation4], 1

</llo_original>
